<compile_context>
chip_gen: v7x
topology: tpu7x:2x2x1
jax: 0.10.0
libtpu: 0.0.40
codegen_flags: <defaults>
</compile_context>

<pallas_src>
import jax
import jax.numpy as jnp
from jax.experimental import pallas as pl
from jax.experimental.pallas import tpu as pltpu

INPUT_DIM = 54    # fetch_covtype features
OUTPUT_DIM = 7    # covtype classes
H1, H2, H3 = 64, 32, 16

PAD_OUT = 8       # logits padded 7 -> 8 (32 B/row, aligned); wrapper slices [:, :7]


def _round_up(x, m):
    return ((x + m - 1) // m) * m


def mlp_kernel(x_ref,
               w12_ref, b12_ref,
               w3_ref, b3_ref,
               w4_ref, b4_ref,
               o_ref):
    # x tile: f32 [block_b, 54]; all weights tiny + resident. MXU dots with f32 accumulation.
    x = x_ref[...]

    # fused linear1+linear2, then ReLU (matches linear1 -> linear2 -> ReLU of the original model)
    h = jnp.dot(x, w12_ref[...], preferred_element_type=jnp.float32) + b12_ref[...]
    h = jnp.maximum(h, 0.0)

    # linear3 + ReLU
    h = jnp.dot(h, w3_ref[...], preferred_element_type=jnp.float32) + b3_ref[...]
    h = jnp.maximum(h, 0.0)

    # linear4 (logits), padded to 8 output columns (column 7 is exact zero)
    h = jnp.dot(h, w4_ref[...], preferred_element_type=jnp.float32) + b4_ref[...]

    o_ref[...] = h.astype(o_ref.dtype)


def prepare_params(params):
    """Fuse linear1+linear2 and pad the final layer's output 7 -> 8. Everything stays f32."""
    w1, b1 = params["w1"], params["b1"]   # (54,64), (1,64)
    w2, b2 = params["w2"], params["b2"]   # (64,32), (1,32)

    w12 = w1 @ w2                         # (54,32)
    b12 = b1 @ w2 + b2                    # (1,32)

    w4p = jnp.zeros((H3, PAD_OUT), jnp.float32).at[:, :OUTPUT_DIM].set(params["w4"])
    b4p = jnp.zeros((1, PAD_OUT), jnp.float32).at[:, :OUTPUT_DIM].set(params["b4"])

    return {
        "w12": w12.astype(jnp.float32),
        "b12": b12.astype(jnp.float32),
        "w3": params["w3"].astype(jnp.float32),
        "b3": params["b3"].astype(jnp.float32),
        "w4": w4p,
        "b4": b4p,
    }


def mlp_forward(x, prepared, *, block_b=2048):
    """x: [B, INPUT_DIM] float32. prepared: output of prepare_params. Returns [B, OUTPUT_DIM] f32."""
    B = x.shape[0]
    # Row tile: multiple of 8, no bigger than the (rounded-up) batch.
    block_b = max(8, min(block_b, _round_up(B, 8)))
    block_b = _round_up(block_b, 8)
    num_blocks = pl.cdiv(B, block_b)

    w12, b12 = prepared["w12"], prepared["b12"]
    w3, b3 = prepared["w3"], prepared["b3"]
    w4, b4 = prepared["w4"], prepared["b4"]

    def full(arr):
        # Whole (tiny) parameter per grid step; stays resident in VMEM.
        ndim = arr.ndim
        return pl.BlockSpec(arr.shape, lambda i, _n=ndim: (0,) * _n)

    out = pl.pallas_call(
        mlp_kernel,
        out_shape=jax.ShapeDtypeStruct((B, PAD_OUT), jnp.float32),
        grid_spec=pltpu.PrefetchScalarGridSpec(
            num_scalar_prefetch=0,
            grid=(num_blocks,),
            in_specs=[
                # x streamed directly: (block_b, 54) f32; last dim equals full array dim.
                pl.BlockSpec((block_b, INPUT_DIM), lambda i: (i, 0)),
                full(w12), full(b12),
                full(w3), full(b3),
                full(w4), full(b4),
            ],
            out_specs=pl.BlockSpec((block_b, PAD_OUT), lambda i: (i, 0)),
        ),
        compiler_params=pltpu.CompilerParams(
            dimension_semantics=("parallel",),      # shards row tiles across v7x's 2 TCs; no-op v5e/v6e
            vmem_limit_bytes=32 * 1024 * 1024,      # tiles are < 1 MiB double-buffered; ample headroom
        ),
    )(x.astype(jnp.float32), w12, b12, w3, b3, w4, b4)

    # Cheap now (32 B/row buffer). Downstream may also consume the (B, 8) buffer directly,
    # but note padded column 7 is exact zero (could beat all-negative real logits in an argmax).
    return out[:, :OUTPUT_DIM]


def init_params(key):
    """Deterministic init mimicking nn.Linear's U(-1/sqrt(fan_in), 1/sqrt(fan_in)).
    Weights stored as [in, out] (transpose of PyTorch's [out, in])."""
    dims = [(INPUT_DIM, H1), (H1, H2), (H2, H3), (H3, OUTPUT_DIM)]
    params = {}
    keys = jax.random.split(key, 2 * len(dims))
    for idx, (din, dout) in enumerate(dims):
        bound = 1.0 / jnp.sqrt(jnp.float32(din))
        w = jax.random.uniform(keys[2 * idx], (din, dout), jnp.float32, -bound, bound)
        b = jax.random.uniform(keys[2 * idx + 1], (1, dout), jnp.float32, -bound, bound)
        params[f"w{idx + 1}"] = w
        params[f"b{idx + 1}"] = b
    return params


def reference_forward(x, params):
    """Original-module semantics in plain JAX (linear1 has no activation)."""
    h = x @ params["w1"] + params["b1"]
    h = h @ params["w2"] + params["b2"]
    h = jnp.maximum(h, 0.0)
    h = h @ params["w3"] + params["b3"]
    h = jnp.maximum(h, 0.0)
    h = h @ params["w4"] + params["b4"]
    return h


def reference_forward_prepared(x, prepared):
    """Same math the kernel runs (fused weights, f32), in plain JAX, for a tight check."""
    h = x @ prepared["w12"] + prepared["b12"]
    h = jnp.maximum(h, 0.0)
    h = h @ prepared["w3"] + prepared["b3"]
    h = jnp.maximum(h, 0.0)
    h = h @ prepared["w4"] + prepared["b4"]
    return h[:, :OUTPUT_DIM]


if __name__ == "__main__":
    key = jax.random.PRNGKey(0)
    k_params, k_x = jax.random.split(key)

    B = 8  # small demo batch; for real workloads sweep block_b in {2048, 4096, 8192}
    params = init_params(k_params)
    prepared = prepare_params(params)
    x = jax.random.normal(k_x, (B, INPUT_DIM), jnp.float32)

    out = mlp_forward(x, prepared)
    out = jax.block_until_ready(out)
    assert out.shape == (B, OUTPUT_DIM)

    # Tight check: kernel vs. identical (fused, f32) math in plain JAX.
    ref_tight = reference_forward_prepared(x, prepared)
    assert jnp.allclose(out, ref_tight, atol=1e-2, rtol=1e-2), \
        float(jnp.max(jnp.abs(out - ref_tight)))

    # Loose check: kernel vs. original (unfused) module semantics — fusion only changes
    # results at the fp-rounding level.
    ref_f32 = reference_forward(x, params)
    assert jnp.allclose(out, ref_f32, atol=3e-2, rtol=3e-2), \
        float(jnp.max(jnp.abs(out - ref_f32)))

    print("KERNEL_OK")
</pallas_src>

<mosaic_0001>
module attributes {stable_mosaic.version = 11 : i64} {
  func.func @mlp_kernel(%arg0: i32, %arg1: memref<8x54xf32, #tpu.memory_space<vmem>>, %arg2: memref<54x32xf32, #tpu.memory_space<vmem>>, %arg3: memref<1x32xf32, #tpu.memory_space<vmem>>, %arg4: memref<32x16xf32, #tpu.memory_space<vmem>>, %arg5: memref<1x16xf32, #tpu.memory_space<vmem>>, %arg6: memref<16x8xf32, #tpu.memory_space<vmem>>, %arg7: memref<1x8xf32, #tpu.memory_space<vmem>>, %arg8: memref<8x8xf32, #tpu.memory_space<vmem>>) attributes {dimension_semantics = [#tpu.dimension_semantics<parallel>], iteration_bounds = array<i64: 1>, scalar_prefetch = 0 : i64, scratch_operands = 0 : i64, tpu.core_type = #tpu.core_type<tc>, window_params = [{transform_indices = @transform_0, window_bounds = array<i64: 8, 54>}, {pipeline_mode = #tpu.pipeline_mode<synchronous>, transform_indices = @transform_1, window_bounds = array<i64: 54, 32>}, {pipeline_mode = #tpu.pipeline_mode<synchronous>, transform_indices = @transform_2, window_bounds = array<i64: 1, 32>}, {pipeline_mode = #tpu.pipeline_mode<synchronous>, transform_indices = @transform_3, window_bounds = array<i64: 32, 16>}, {pipeline_mode = #tpu.pipeline_mode<synchronous>, transform_indices = @transform_4, window_bounds = array<i64: 1, 16>}, {pipeline_mode = #tpu.pipeline_mode<synchronous>, transform_indices = @transform_5, window_bounds = array<i64: 16, 8>}, {pipeline_mode = #tpu.pipeline_mode<synchronous>, transform_indices = @transform_6, window_bounds = array<i64: 1, 8>}, {transform_indices = @transform_7, window_bounds = array<i64: 8, 8>}]} {
    %c0 = arith.constant 0 : index
    %c0_0 = arith.constant 0 : index
    %0 = vector.load %arg1[%c0, %c0_0] : memref<8x54xf32, #tpu.memory_space<vmem>>, vector<8x54xf32>
    %c0_1 = arith.constant 0 : index
    %c0_2 = arith.constant 0 : index
    %1 = vector.load %arg2[%c0_1, %c0_2] : memref<54x32xf32, #tpu.memory_space<vmem>>, vector<54x32xf32>
    %cst = arith.constant dense<0.000000e+00> : vector<8x32xf32>
    %2 = tpu.matmul %0, %1, %cst {dimension_numbers = #tpu.dot_dimension_numbers<[1], [0], [0], [1], [0, 0, 1, 1], [], []>} : vector<8x54xf32>, vector<54x32xf32>, vector<8x32xf32> -> vector<8x32xf32>
    %c0_3 = arith.constant 0 : index
    %c0_4 = arith.constant 0 : index
    %3 = vector.load %arg3[%c0_3, %c0_4] : memref<1x32xf32, #tpu.memory_space<vmem>>, vector<1x32xf32>
    %4 = vector.broadcast %3 : vector<1x32xf32> to vector<8x32xf32>
    %5 = arith.addf %2, %4 : vector<8x32xf32>
    %cst_5 = arith.constant 0.000000e+00 : f32
    %6 = vector.broadcast %cst_5 : f32 to vector<8x32xf32>
    %7 = arith.maximumf %5, %6 : vector<8x32xf32>
    %c0_6 = arith.constant 0 : index
    %c0_7 = arith.constant 0 : index
    %8 = vector.load %arg4[%c0_6, %c0_7] : memref<32x16xf32, #tpu.memory_space<vmem>>, vector<32x16xf32>
    %cst_8 = arith.constant dense<0.000000e+00> : vector<8x16xf32>
    %9 = tpu.matmul %7, %8, %cst_8 {dimension_numbers = #tpu.dot_dimension_numbers<[1], [0], [0], [1], [0, 0, 1, 1], [], []>} : vector<8x32xf32>, vector<32x16xf32>, vector<8x16xf32> -> vector<8x16xf32>
    %c0_9 = arith.constant 0 : index
    %c0_10 = arith.constant 0 : index
    %10 = vector.load %arg5[%c0_9, %c0_10] : memref<1x16xf32, #tpu.memory_space<vmem>>, vector<1x16xf32>
    %11 = vector.broadcast %10 : vector<1x16xf32> to vector<8x16xf32>
    %12 = arith.addf %9, %11 : vector<8x16xf32>
    %cst_11 = arith.constant 0.000000e+00 : f32
    %13 = vector.broadcast %cst_11 : f32 to vector<8x16xf32>
    %14 = arith.maximumf %12, %13 : vector<8x16xf32>
    %c0_12 = arith.constant 0 : index
    %c0_13 = arith.constant 0 : index
    %15 = vector.load %arg6[%c0_12, %c0_13] : memref<16x8xf32, #tpu.memory_space<vmem>>, vector<16x8xf32>
    %cst_14 = arith.constant dense<0.000000e+00> : vector<8x8xf32>
    %16 = tpu.matmul %14, %15, %cst_14 {dimension_numbers = #tpu.dot_dimension_numbers<[1], [0], [0], [1], [0, 0, 1, 1], [], []>} : vector<8x16xf32>, vector<16x8xf32>, vector<8x8xf32> -> vector<8x8xf32>
    %c0_15 = arith.constant 0 : index
    %c0_16 = arith.constant 0 : index
    %17 = vector.load %arg7[%c0_15, %c0_16] : memref<1x8xf32, #tpu.memory_space<vmem>>, vector<1x8xf32>
    %18 = vector.broadcast %17 : vector<1x8xf32> to vector<8x8xf32>
    %19 = arith.addf %16, %18 : vector<8x8xf32>
    %c0_17 = arith.constant 0 : index
    %c0_18 = arith.constant 0 : index
    %20 = vector.load %arg8[%c0_17, %c0_18] : memref<8x8xf32, #tpu.memory_space<vmem>>, vector<8x8xf32>
    tpu.vector_store %arg8[%c0_17, %c0_18], %19 {strides = array<i32>} : memref<8x8xf32, #tpu.memory_space<vmem>>, vector<8x8xf32>,
    return
  }
  func.func @transform_0(%arg0: i32) -> (i32, i32) {
    %c0_i32 = arith.constant 0 : i32
    %c0_i32_0 = arith.constant 0 : i32
    return %arg0, %c0_i32 : i32, i32
  }
  func.func @transform_1(%arg0: i32) -> (i32, i32) {
    %c0_i32 = arith.constant 0 : i32
    %c0_i32_0 = arith.constant 0 : i32
    %c0_i32_1 = arith.constant 0 : i32
    return %c0_i32, %c0_i32_0 : i32, i32
  }
  func.func @transform_2(%arg0: i32) -> (i32, i32) {
    %c0_i32 = arith.constant 0 : i32
    %c0_i32_0 = arith.constant 0 : i32
    %c0_i32_1 = arith.constant 0 : i32
    return %c0_i32, %c0_i32_0 : i32, i32
  }
  func.func @transform_3(%arg0: i32) -> (i32, i32) {
    %c0_i32 = arith.constant 0 : i32
    %c0_i32_0 = arith.constant 0 : i32
    %c0_i32_1 = arith.constant 0 : i32
    return %c0_i32, %c0_i32_0 : i32, i32
  }
  func.func @transform_4(%arg0: i32) -> (i32, i32) {
    %c0_i32 = arith.constant 0 : i32
    %c0_i32_0 = arith.constant 0 : i32
    %c0_i32_1 = arith.constant 0 : i32
    return %c0_i32, %c0_i32_0 : i32, i32
  }
  func.func @transform_5(%arg0: i32) -> (i32, i32) {
    %c0_i32 = arith.constant 0 : i32
    %c0_i32_0 = arith.constant 0 : i32
    %c0_i32_1 = arith.constant 0 : i32
    return %c0_i32, %c0_i32_0 : i32, i32
  }
  func.func @transform_6(%arg0: i32) -> (i32, i32) {
    %c0_i32 = arith.constant 0 : i32
    %c0_i32_0 = arith.constant 0 : i32
    %c0_i32_1 = arith.constant 0 : i32
    return %c0_i32, %c0_i32_0 : i32, i32
  }
  func.func @transform_7(%arg0: i32) -> (i32, i32) {
    %c0_i32 = arith.constant 0 : i32
    %c0_i32_0 = arith.constant 0 : i32
    return %arg0, %c0_i32 : i32, i32
  }
}

</mosaic_0001>

<llo_original>
// kernel: tpu_custom_call.1
$region0: #{tpu_custom_call.1}
  #allocation0 [shape = 'u32[]', space=smem, size = 0x4, offset = 0x4, fixed_abs, tag = 'smem constant byte address 0x4 - core index']
  #allocation1 [shape = 'u32[144,128]{1,0:T(1,128)}', space=vmem, size = 0x12000, scoped, tag = 'internal scratch']
  %s0 = inlined_call_operand.vmem [shape: f32[8,54], index: 0, kind: input, shape index: {}]
  %s1 = inlined_call_operand.vmem [shape: f32[54,32], index: 1, kind: input, shape index: {}]
  %s2 = inlined_call_operand.vmem [shape: f32[1,32], index: 2, kind: input, shape index: {}]
  %s3 = inlined_call_operand.vmem [shape: f32[32,16], index: 3, kind: input, shape index: {}]
  %s4 = inlined_call_operand.vmem [shape: f32[1,16], index: 4, kind: input, shape index: {}]
  %s5 = inlined_call_operand.vmem [shape: f32[16,8], index: 5, kind: input, shape index: {}]
  %s6 = inlined_call_operand.vmem [shape: f32[1,8], index: 6, kind: input, shape index: {}]
  %s7 = inlined_call_operand.hbm [shape: f32[8,8], index: 7, kind: output, shape index: {}]
  %s8 = sld [smem:[#allocation0]]
  $region38: #{tpu_custom_call.1} parent=0
    _
  %s10 = ssub.s32 1, %s8
  %s11 = scalar_select 0, %s10, %s8
  $region1: #{tpu_custom_call.1} parent=0
    #allocation2 [shape = 'u8[4096]{0}', space=vmem, size = 0x1000, scoped, tag = 'output window, operand 0, single buffered']
    #allocation3 [shape = 's32[1]{0}', space=sflag, size = 0x4, scoped, tag = 'scoped memory for tpu_custom_call.1']
    %12 = vsyncpa [#allocation3], 0
    // Predicated region
    $region2: #{tpu_custom_call.1} parent=1 // pred_check
      _
    $region3: #{tpu_custom_call.1} parent=1 // pred_check_branch
      %14 = sbr.rel (0) target = $region5
    $region4: #{tpu_custom_call.1} parent=1 // pred_region
      _
    $region5: #{tpu_custom_call.1} parent=1 // pred_fallthru
      _
    // Predicated region
    $region6: #{tpu_custom_call.1} parent=1 // pred_check
      _
    $region7: #{tpu_custom_call.1} parent=1 // pred_check_branch
      %16 = sbr.rel (0) target = $region9
    $region8: #{tpu_custom_call.1} parent=1 // pred_region
      _
    $region9: #{tpu_custom_call.1} parent=1 // pred_fallthru
      _
    // Predicated region
    $region10: #{tpu_custom_call.1} parent=1 // pred_check
      _
    $region11: #{tpu_custom_call.1} parent=1 // pred_check_branch
      %18 = sbr.rel (0) target = $region13
    $region12: #{tpu_custom_call.1} parent=1 // pred_region
      _
    $region13: #{tpu_custom_call.1} parent=1 // pred_fallthru
      _
    // Predicated region
    $region14: #{tpu_custom_call.1} parent=1 // pred_check
      _
    $region15: #{tpu_custom_call.1} parent=1 // pred_check_branch
      %20 = sbr.rel (0) target = $region17
    $region16: #{tpu_custom_call.1} parent=1 // pred_region
      _
    $region17: #{tpu_custom_call.1} parent=1 // pred_fallthru
      _
    // Predicated region
    $region18: #{tpu_custom_call.1} parent=1 // pred_check
      _
    $region19: #{tpu_custom_call.1} parent=1 // pred_check_branch
      %22 = sbr.rel (0) target = $region21
    $region20: #{tpu_custom_call.1} parent=1 // pred_region
      _
    $region21: #{tpu_custom_call.1} parent=1 // pred_fallthru
      _
    // Predicated region
    $region22: #{tpu_custom_call.1} parent=1 // pred_check
      _
    $region23: #{tpu_custom_call.1} parent=1 // pred_check_branch
      %24 = sbr.rel (0) target = $region25
    $region24: #{tpu_custom_call.1} parent=1 // pred_region
      _
    $region25: #{tpu_custom_call.1} parent=1 // pred_fallthru
      _
    // Predicated region
    $region26: #{tpu_custom_call.1} parent=1 // pred_check
      _
    $region27: #{tpu_custom_call.1} parent=1 // pred_check_branch
      %26 = sbr.rel (0) target = $region29
    $region28: #{tpu_custom_call.1} parent=1 // pred_region
      _
    $region29: #{tpu_custom_call.1} parent=1 // pred_fallthru
      _
    %v27 = vld [vmem:[%s0] sm:$0xff]
    %v28 = vld [vmem:[%s1] sm:$0xff]
    %v29 = vld [vmem:[%s1 + $0x8] sm:$0xff]
    %v30 = vld [vmem:[%s1 + $0x10] sm:$0xff]
    %v31 = vld [vmem:[%s1 + $0x18] sm:$0xff]
    %v32 = vld [vmem:[%s1 + $0x20] sm:$0xff]
    %v33 = vld [vmem:[%s1 + $0x28] sm:$0xff]
    %v34 = vld [vmem:[%s1 + $0x30] sm:$0x3f]
    %v35 = vld [vmem:[%s2] sm:$0x1]
    %v37 = vlaneseq
    %v38 = vshrl.u32 %v37, 7
    %v39 = vsub.s32 0, %v38
    %v40 = vrot.slane %v35, %v39
    %vm42 = vcmask 441344
    %v44 = vsel %vm42, %v27, 0
    %vm46 = vcmask 1045504
    %v48 = vsel %vm46, %v34, 0
    %50 = vmatprep.subr.mxu0 0.0
    %51 = vmatpush1.msra.mxu0 %v28
    %52 = vmatprep.subr.mxu0 0.0
    %53 = vmatpush1.msra.mxu0 %v29
    %54 = vmatprep.subr.mxu0 0.0
    %55 = vmatpush1.msra.mxu0 %v30
    %56 = vmatprep.subr.mxu0 0.0
    %57 = vmatpush1.msra.mxu0 %v31
    %58 = vmatprep.subr.mxu0 0.0
    %59 = vmatpush1.msra.mxu0 %v32
    %60 = vmatprep.subr.mxu0 0.0
    %61 = vmatpush1.msra.mxu0 %v33
    %62 = vmatprep.subr.mxu0 0.0
    %63 = vmatpush1.msra.mxu0 %v48
    %64 = vmatprep.subr.mxu0 0.0
    %65 = vmatpush1.msra.mxu0 0.0
    %66 = vmatprep.subr.mxu0 0.0
    %67 = vmatpush1.msra.mxu0 0.0
    %68 = vmatprep.subr.mxu0 0.0
    %69 = vmatpush1.msra.mxu0 0.0
    %70 = vmatprep.subr.mxu0 0.0
    %71 = vmatpush1.msra.mxu0 0.0
    %72 = vmatprep.subr.mxu0 0.0
    %73 = vmatpush1.msra.mxu0 0.0
    %74 = vmatprep.subr.mxu0 0.0
    %75 = vmatpush1.msra.mxu0 0.0
    %76 = vmatprep.subr.mxu0 0.0
    %77 = vmatpush1.msra.mxu0 0.0
    %78 = vmatprep.subr.mxu0 0.0
    %79 = vmatpush1.msra.mxu0 0.0
    %80 = vmatprep.subr.mxu0 0.0
    %81 = vmatpush1.msra.mxu0 0.0
    %82 = vmatprep.subr.mxu0 0.0
    %83 = vmatpush1.msra.mxu0 0.0
    %84 = vmatprep.subr.mxu0 0.0
    %85 = vmatpush1.msra.mxu0 0.0
    %86 = vmatprep.subr.mxu0 0.0
    %87 = vmatpush1.msra.mxu0 0.0
    %88 = vmatprep.subr.mxu0 0.0
    %89 = vmatpush1.msra.mxu0 0.0
    %90 = vmatprep.subr.mxu0 0.0
    %91 = vmatpush1.msra.mxu0 0.0
    %92 = vmatprep.subr.mxu0 0.0
    %93 = vmatpush1.msra.mxu0 0.0
    %94 = vmatprep.subr.mxu0 0.0
    %95 = vmatpush1.msra.mxu0 0.0
    %96 = vmatprep.subr.mxu0 0.0
    %97 = vmatpush1.msra.mxu0 0.0
    %98 = vmatprep.subr.mxu0 0.0
    %99 = vmatpush1.msra.mxu0 0.0
    %100 = vmatprep.subr.mxu0 0.0
    %101 = vmatpush1.msra.mxu0 0.0
    %102 = vmatprep.subr.mxu0 0.0
    %103 = vmatpush1.msra.mxu0 0.0
    %104 = vmatprep.subr.mxu0 0.0
    %105 = vmatpush1.msra.mxu0 0.0
    %106 = vmatprep.subr.mxu0 0.0
    %107 = vmatpush1.msra.mxu0 0.0
    %108 = vmatprep.subr.mxu0 0.0
    %109 = vmatpush1.msra.mxu0 0.0
    %110 = vmatprep.subr.mxu0 0.0
    %111 = vmatpush1.msra.mxu0 0.0
    %112 = vmatprep.subr.mxu0 0.0
    %113 = vmatpush1.msra.mxu0 0.0
    %114 = vmatprep.mubr.f32.mxu0 0.0
    %115 = vmatmul.mubr.f32.gmra.mrb[0].mxu0 %v44
    %v116 = vpop.f32.mrb[0].mxu0
    %v117 = vadd.f32 %v40, %v116
    %v118 = vpop.f32.mrb[0].mxu0
    %119 = vdwg.mxu0
    %v120 = vmax.f32 %v117, 0.0
    %v121 = vld [vmem:[%s3] sm:$0xff]
    %v122 = vld [vmem:[%s3 + $0x8] sm:$0xff]
    %v123 = vld [vmem:[%s3 + $0x10] sm:$0xff]
    %v124 = vld [vmem:[%s3 + $0x18] sm:$0xff]
    %v125 = vld [vmem:[%s4] sm:$0x1]
    %v127 = vlaneseq
    %v128 = vshrl.u32 %v127, 7
    %v129 = vsub.s32 0, %v128
    %v130 = vrot.slane %v125, %v129
    %vm132 = vcmask 261120
    %v134 = vsel %vm132, %v120, 0
    %136 = vmatprep.subr.mxu0 0.0
    %137 = vmatpush1.msra.mxu0 %v121
    %138 = vmatprep.subr.mxu0 0.0
    %139 = vmatpush1.msra.mxu0 %v122
    %140 = vmatprep.subr.mxu0 0.0
    %141 = vmatpush1.msra.mxu0 %v123
    %142 = vmatprep.subr.mxu0 0.0
    %143 = vmatpush1.msra.mxu0 %v124
    %144 = vmatprep.subr.mxu0 0.0
    %145 = vmatpush1.msra.mxu0 0.0
    %146 = vmatprep.subr.mxu0 0.0
    %147 = vmatpush1.msra.mxu0 0.0
    %148 = vmatprep.subr.mxu0 0.0
    %149 = vmatpush1.msra.mxu0 0.0
    %150 = vmatprep.subr.mxu0 0.0
    %151 = vmatpush1.msra.mxu0 0.0
    %152 = vmatprep.subr.mxu0 0.0
    %153 = vmatpush1.msra.mxu0 0.0
    %154 = vmatprep.subr.mxu0 0.0
    %155 = vmatpush1.msra.mxu0 0.0
    %156 = vmatprep.subr.mxu0 0.0
    %157 = vmatpush1.msra.mxu0 0.0
    %158 = vmatprep.subr.mxu0 0.0
    %159 = vmatpush1.msra.mxu0 0.0
    %160 = vmatprep.subr.mxu0 0.0
    %161 = vmatpush1.msra.mxu0 0.0
    %162 = vmatprep.subr.mxu0 0.0
    %163 = vmatpush1.msra.mxu0 0.0
    %164 = vmatprep.subr.mxu0 0.0
    %165 = vmatpush1.msra.mxu0 0.0
    %166 = vmatprep.subr.mxu0 0.0
    %167 = vmatpush1.msra.mxu0 0.0
    %168 = vmatprep.subr.mxu0 0.0
    %169 = vmatpush1.msra.mxu0 0.0
    %170 = vmatprep.subr.mxu0 0.0
    %171 = vmatpush1.msra.mxu0 0.0
    %172 = vmatprep.subr.mxu0 0.0
    %173 = vmatpush1.msra.mxu0 0.0
    %174 = vmatprep.subr.mxu0 0.0
    %175 = vmatpush1.msra.mxu0 0.0
    %176 = vmatprep.subr.mxu0 0.0
    %177 = vmatpush1.msra.mxu0 0.0
    %178 = vmatprep.subr.mxu0 0.0
    %179 = vmatpush1.msra.mxu0 0.0
    %180 = vmatprep.subr.mxu0 0.0
    %181 = vmatpush1.msra.mxu0 0.0
    %182 = vmatprep.subr.mxu0 0.0
    %183 = vmatpush1.msra.mxu0 0.0
    %184 = vmatprep.subr.mxu0 0.0
    %185 = vmatpush1.msra.mxu0 0.0
    %186 = vmatprep.subr.mxu0 0.0
    %187 = vmatpush1.msra.mxu0 0.0
    %188 = vmatprep.subr.mxu0 0.0
    %189 = vmatpush1.msra.mxu0 0.0
    %190 = vmatprep.subr.mxu0 0.0
    %191 = vmatpush1.msra.mxu0 0.0
    %192 = vmatprep.subr.mxu0 0.0
    %193 = vmatpush1.msra.mxu0 0.0
    %194 = vmatprep.subr.mxu0 0.0
    %195 = vmatpush1.msra.mxu0 0.0
    %196 = vmatprep.subr.mxu0 0.0
    %197 = vmatpush1.msra.mxu0 0.0
    %198 = vmatprep.subr.mxu0 0.0
    %199 = vmatpush1.msra.mxu0 0.0
    %200 = vmatprep.mubr.f32.mxu0 0.0
    %201 = vmatmul.mubr.f32.gmra.mrb[0].mxu0 %v134
    %v202 = vpop.f32.mrb[0].mxu0
    %v203 = vadd.f32 %v130, %v202
    %v204 = vpop.f32.mrb[0].mxu0
    %205 = vdwg.mxu0
    %v206 = vmax.f32 %v203, 0.0
    %v207 = vld [vmem:[%s5] sm:$0xff]
    %v208 = vld [vmem:[%s5 + $0x8] sm:$0xff]
    %v209 = vld [vmem:[%s6] sm:$0x1]
    %v211 = vlaneseq
    %v212 = vshrl.u32 %v211, 7
    %v213 = vsub.s32 0, %v212
    %v214 = vrot.slane %v209, %v213
    %vm216 = vcmask 130048
    %v218 = vsel %vm216, %v206, 0
    %220 = vmatprep.subr.mxu0 0.0
    %221 = vmatpush1.msra.mxu0 %v207
    %222 = vmatprep.subr.mxu0 0.0
    %223 = vmatpush1.msra.mxu0 %v208
    %224 = vmatprep.subr.mxu0 0.0
    %225 = vmatpush1.msra.mxu0 0.0
    %226 = vmatprep.subr.mxu0 0.0
    %227 = vmatpush1.msra.mxu0 0.0
    %228 = vmatprep.subr.mxu0 0.0
    %229 = vmatpush1.msra.mxu0 0.0
    %230 = vmatprep.subr.mxu0 0.0
    %231 = vmatpush1.msra.mxu0 0.0
    %232 = vmatprep.subr.mxu0 0.0
    %233 = vmatpush1.msra.mxu0 0.0
    %234 = vmatprep.subr.mxu0 0.0
    %235 = vmatpush1.msra.mxu0 0.0
    %236 = vmatprep.subr.mxu0 0.0
    %237 = vmatpush1.msra.mxu0 0.0
    %238 = vmatprep.subr.mxu0 0.0
    %239 = vmatpush1.msra.mxu0 0.0
    %240 = vmatprep.subr.mxu0 0.0
    %241 = vmatpush1.msra.mxu0 0.0
    %242 = vmatprep.subr.mxu0 0.0
    %243 = vmatpush1.msra.mxu0 0.0
    %244 = vmatprep.subr.mxu0 0.0
    %245 = vmatpush1.msra.mxu0 0.0
    %246 = vmatprep.subr.mxu0 0.0
    %247 = vmatpush1.msra.mxu0 0.0
    %248 = vmatprep.subr.mxu0 0.0
    %249 = vmatpush1.msra.mxu0 0.0
    %250 = vmatprep.subr.mxu0 0.0
    %251 = vmatpush1.msra.mxu0 0.0
    %252 = vmatprep.subr.mxu0 0.0
    %253 = vmatpush1.msra.mxu0 0.0
    %254 = vmatprep.subr.mxu0 0.0
    %255 = vmatpush1.msra.mxu0 0.0
    %256 = vmatprep.subr.mxu0 0.0
    %257 = vmatpush1.msra.mxu0 0.0
    %258 = vmatprep.subr.mxu0 0.0
    %259 = vmatpush1.msra.mxu0 0.0
    %260 = vmatprep.subr.mxu0 0.0
    %261 = vmatpush1.msra.mxu0 0.0
    %262 = vmatprep.subr.mxu0 0.0
    %263 = vmatpush1.msra.mxu0 0.0
    %264 = vmatprep.subr.mxu0 0.0
    %265 = vmatpush1.msra.mxu0 0.0
    %266 = vmatprep.subr.mxu0 0.0
    %267 = vmatpush1.msra.mxu0 0.0
    %268 = vmatprep.subr.mxu0 0.0
    %269 = vmatpush1.msra.mxu0 0.0
    %270 = vmatprep.subr.mxu0 0.0
    %271 = vmatpush1.msra.mxu0 0.0
    %272 = vmatprep.subr.mxu0 0.0
    %273 = vmatpush1.msra.mxu0 0.0
    %274 = vmatprep.subr.mxu0 0.0
    %275 = vmatpush1.msra.mxu0 0.0
    %276 = vmatprep.subr.mxu0 0.0
    %277 = vmatpush1.msra.mxu0 0.0
    %278 = vmatprep.subr.mxu0 0.0
    %279 = vmatpush1.msra.mxu0 0.0
    %280 = vmatprep.subr.mxu0 0.0
    %281 = vmatpush1.msra.mxu0 0.0
    %282 = vmatprep.subr.mxu0 0.0
    %283 = vmatpush1.msra.mxu0 0.0
    %284 = vmatprep.mubr.f32.mxu0 0.0
    %285 = vmatmul.mubr.f32.gmra.mrb[0].mxu0 %v218
    %v286 = vpop.f32.mrb[0].mxu0
    %v287 = vadd.f32 %v214, %v286
    %v288 = vpop.f32.mrb[0].mxu0
    %289 = vdwg.mxu0
    %vm290 = vcmask 64512
    %291 = vst.msk [vmem:[#allocation2] sm:$0xff] %vm290, %v287
    // Predicated region
    $region30: #{tpu_custom_call.1} parent=1 // pred_check
      _
    $region31: #{tpu_custom_call.1} parent=1 // pred_check_branch
      %293 = sbr.rel (0) target = $region33
    $region32: #{tpu_custom_call.1} parent=1 // pred_region
      %s295 = ssub.s32 128, 128
      %296 = vsyncadd [#allocation3], %s295
      %s298 = sshll.u32 [#allocation2], 4
      %s299 = int_to_ptr.vmem [resolvable:$true] %s298
      %301 = dma.vmem_to_hbm [thread:$0]  %s299, 128, %s7, [#allocation3]
    $region33: #{tpu_custom_call.1} parent=1 // pred_fallthru
      _
    // Predicated region
    $region34: #{tpu_custom_call.1} parent=1 // pred_check
      _
    $region35: #{tpu_custom_call.1} parent=1 // pred_check_branch
      %303 = sbr.rel (0) target = $region37
    $region36: #{tpu_custom_call.1} parent=1 // pred_region
      %304 = dma.done [#allocation3], 128
    $region37: #{tpu_custom_call.1} parent=1 // pred_fallthru
      _
    %305 = vsyncpa [#allocation3], 1

</llo_original>
